<compile_context>
chip_gen: v7x
topology: tpu7x:2x2x1
jax: 0.10.0
libtpu: 0.0.40
codegen_flags: <defaults>
</compile_context>

<pallas_src>
import functools

import jax
import jax.numpy as jnp
from jax import lax
from jax.experimental import pallas as pl
from jax.experimental.pallas import tpu as pltpu


def _round_up(x: int, m: int) -> int:
    return ((x + m - 1) // m) * m


def _fape_kernel(a_ref, c_ref, x_ref, o_ref, *,
                 n_frames: int, n_points: int,
                 f_tile: int, p_tile: int,
                 d_clamp: float, eps: float):
    """One (F-block, P-block) grid step.

    a_ref : [3*f_tile, 6]   packed a-major: rows a*f_tile + f, cols [Rp[:,a] | -Rt[:,a]]
    c_ref : [3*f_tile, 1]   per-frame constant (Rp^T tp - Rt^T tt), same a-major packing
    x_ref : [6, p_tile]     stacked points [x_pred ; x_true]
    o_ref : [8, 128]        per-F-block partial sums (resident across the P axis)
    """
    fi = pl.program_id(0)
    pi = pl.program_id(1)

    @pl.when(pi == 0)
    def _init():
        o_ref[...] = jnp.zeros_like(o_ref)

    # diff[a*f_tile + f, p] = (Rp^T x_pred - Rt^T x_true)[f, a, p] - c[f, a]
    #                       = (Rp^T (x_pred - tp) - Rt^T (x_true - tt))[f, a, p]
    diff = jnp.dot(a_ref[...], x_ref[...],
                   preferred_element_type=jnp.float32) - c_ref[...]  # [3*f_tile, p_tile]

    d0 = diff[0 * f_tile:1 * f_tile, :]
    d1 = diff[1 * f_tile:2 * f_tile, :]
    d2 = diff[2 * f_tile:3 * f_tile, :]
    sq = d0 * d0 + d1 * d1 + d2 * d2                                  # [f_tile, p_tile]

    d = jnp.sqrt(sq + eps)
    clamped = jnp.minimum(d, d_clamp)

    # mask out padded frames / points so they contribute exactly zero
    f_ids = fi * f_tile + lax.broadcasted_iota(jnp.int32, (f_tile, p_tile), 0)
    p_ids = pi * p_tile + lax.broadcasted_iota(jnp.int32, (f_tile, p_tile), 1)
    valid = (f_ids < n_frames) & (p_ids < n_points)
    clamped = jnp.where(valid, clamped, 0.0)

    # reduce the tile to a single (8, 128) vreg of partial sums:
    # static, tile-aligned slices -> one VALU add per vreg, no XLU / reshape needed.
    part = None
    for fo in range(f_tile // 8):
        for po in range(p_tile // 128):
            blk = clamped[fo * 8:(fo + 1) * 8, po * 128:(po + 1) * 128]
            part = blk if part is None else part + blk

    o_ref[...] += part


def compute_fape(R_pred, t_pred, R_true, t_true, x_pred, x_true,
                 d_clamp: float = 10.0, eps: float = 1e-8,
                 f_tile: int = 128, p_tile: int = 512):
    """R_*: [F, 3, 3], t_*: [F, 3], x_*: [3, P]  ->  scalar f32 FAPE loss."""
    F = int(R_pred.shape[0])
    P = int(x_pred.shape[1])

    # tile sizes: sublane-aligned F tile, lane-aligned P tile, clamped to problem size
    F_t = _round_up(min(f_tile, _round_up(F, 8)), 8)
    P_t = _round_up(min(p_tile, _round_up(P, 128)), 128)
    F_pad = _round_up(F, F_t)
    P_pad = _round_up(P, P_t)
    num_fb = F_pad // F_t
    num_pb = P_pad // P_t

    Rp = R_pred.astype(jnp.float32)
    Rt = R_true.astype(jnp.float32)
    tp = t_pred.astype(jnp.float32)
    tt = t_true.astype(jnp.float32)

    # A[f, a, 0:3] = Rp[f, :, a],  A[f, a, 3:6] = -Rt[f, :, a]
    A = jnp.concatenate([jnp.transpose(Rp, (0, 2, 1)),
                         -jnp.transpose(Rt, (0, 2, 1))], axis=-1)     # [F, 3, 6]
    # c[f, a] = sum_b Rp[f,b,a]*tp[f,b] - sum_b Rt[f,b,a]*tt[f,b]
    c = (jnp.einsum('fba,fb->fa', Rp, tp)
         - jnp.einsum('fba,fb->fa', Rt, tt))                           # [F, 3]

    A = jnp.pad(A, ((0, F_pad - F), (0, 0), (0, 0)))
    c = jnp.pad(c, ((0, F_pad - F), (0, 0)))

    # per-F-block a-major packing: row index = fi*3*F_t + a*F_t + f_local
    A_packed = (A.reshape(num_fb, F_t, 3, 6)
                  .transpose(0, 2, 1, 3)
                  .reshape(num_fb * 3 * F_t, 6))
    c_packed = (c.reshape(num_fb, F_t, 3)
                  .transpose(0, 2, 1)
                  .reshape(num_fb * 3 * F_t, 1))

    X = jnp.concatenate([x_pred.astype(jnp.float32),
                         x_true.astype(jnp.float32)], axis=0)          # [6, P]
    X = jnp.pad(X, ((0, 0), (0, P_pad - P)))                           # [6, P_pad]

    kernel = functools.partial(
        _fape_kernel,
        n_frames=F, n_points=P, f_tile=F_t, p_tile=P_t,
        d_clamp=float(d_clamp), eps=float(eps))

    partials = pl.pallas_call(
        kernel,
        out_shape=jax.ShapeDtypeStruct((num_fb * 8, 128), jnp.float32),
        grid=(num_fb, num_pb),
        in_specs=[
            pl.BlockSpec((3 * F_t, 6), lambda fi, pi: (fi, 0)),   # A (per F-block)
            pl.BlockSpec((3 * F_t, 1), lambda fi, pi: (fi, 0)),   # c (per F-block)
            pl.BlockSpec((6, P_t),     lambda fi, pi: (0, pi)),   # X (per P-block)
        ],
        out_specs=pl.BlockSpec((8, 128), lambda fi, pi: (fi, 0)),
        compiler_params=pltpu.CompilerParams(
            dimension_semantics=("parallel", "arbitrary")),
    )(A_packed, c_packed, X)

    total = jnp.sum(partials)
    return total / (F * P * d_clamp)


def _fape_reference(R_pred, t_pred, R_true, t_true, x_pred, x_true,
                    d_clamp=10.0, eps=1e-8):
    """Pure-JAX reference (same math, obvious einsum form)."""
    dp = x_pred.T[None, :, :] - t_pred[:, None, :]          # [F, P, 3]
    dt = x_true.T[None, :, :] - t_true[:, None, :]
    lp = jnp.einsum('fba,fpb->fpa', R_pred, dp)             # R^T (x - t)
    lt = jnp.einsum('fba,fpb->fpa', R_true, dt)
    d = jnp.sqrt(jnp.sum((lp - lt) ** 2, axis=-1) + eps)    # [F, P]
    return jnp.mean(jnp.minimum(d, d_clamp)) / d_clamp


def _random_rotations(key, n):
    m = jax.random.normal(key, (n, 3, 3), dtype=jnp.float32)
    q, _ = jnp.linalg.qr(m)
    return q.astype(jnp.float32)


if __name__ == "__main__":
    key = jax.random.PRNGKey(0)
    k1, k2, k3, k4, k5, k6 = jax.random.split(key, 6)

    # deliberately non-aligned small shapes to exercise the padding/mask path
    F, P = 10, 200  # frames, points

    R_pred = _random_rotations(k1, F)
    R_true = _random_rotations(k2, F)
    t_pred = 3.0 * jax.random.normal(k3, (F, 3), dtype=jnp.float32)
    t_true = 3.0 * jax.random.normal(k4, (F, 3), dtype=jnp.float32)
    x_pred = 5.0 * jax.random.normal(k5, (3, P), dtype=jnp.float32)
    x_true = x_pred + 0.5 * jax.random.normal(k6, (3, P), dtype=jnp.float32)

    ref = _fape_reference(R_pred, t_pred, R_true, t_true, x_pred, x_true)

    # single-block grid (default tiles clamp to the problem size)
    loss = compute_fape(R_pred, t_pred, R_true, t_true, x_pred, x_true)
    loss = jax.block_until_ready(loss)
    assert jnp.allclose(loss, ref, atol=1e-5, rtol=1e-5), (loss, ref)

    # multi-block grid: 2 F-blocks x 2 P-blocks, accumulation + masking exercised
    loss2 = compute_fape(R_pred, t_pred, R_true, t_true, x_pred, x_true,
                         f_tile=8, p_tile=128)
    loss2 = jax.block_until_ready(loss2)
    assert jnp.allclose(loss2, ref, atol=1e-5, rtol=1e-5), (loss2, ref)

    print("KERNEL_OK")
</pallas_src>

<mosaic_0001>
module attributes {stable_mosaic.version = 11 : i64} {
  func.func @_fape_kernel(%arg0: i32, %arg1: i32, %arg2: memref<48x6xf32, #tpu.memory_space<vmem>>, %arg3: memref<48x1xf32, #tpu.memory_space<vmem>>, %arg4: memref<6x256xf32, #tpu.memory_space<vmem>>, %arg5: memref<8x128xf32, #tpu.memory_space<vmem>>) attributes {dimension_semantics = [#tpu.dimension_semantics<parallel>, #tpu.dimension_semantics<arbitrary>], iteration_bounds = array<i64: 1, 1>, scalar_prefetch = 0 : i64, scratch_operands = 0 : i64, tpu.core_type = #tpu.core_type<tc>, window_params = [{transform_indices = @transform_0, window_bounds = array<i64: 48, 6>}, {transform_indices = @transform_1, window_bounds = array<i64: 48, 1>}, {transform_indices = @transform_2, window_bounds = array<i64: 6, 256>}, {transform_indices = @transform_3, window_bounds = array<i64: 8, 128>}]} {
    %c0_i32 = arith.constant 0 : i32
    %0 = arith.cmpi eq, %arg1, %c0_i32 : i32
    %1 = arith.extui %0 : i1 to i32
    %c0_i32_0 = arith.constant 0 : i32
    %2 = arith.cmpi ne, %1, %c0_i32_0 : i32
    scf.if %2 {
      %cst_13 = arith.constant 0.000000e+00 : f32
      %47 = vector.broadcast %cst_13 : f32 to vector<8x128xf32>
      %c0_14 = arith.constant 0 : index
      %c0_15 = arith.constant 0 : index
      %48 = vector.load %arg5[%c0_14, %c0_15] : memref<8x128xf32, #tpu.memory_space<vmem>>, vector<8x128xf32>
      tpu.vector_store %arg5[%c0_14, %c0_15], %47 {strides = array<i32>} : memref<8x128xf32, #tpu.memory_space<vmem>>, vector<8x128xf32>,
    } else {
    }
    %c0 = arith.constant 0 : index
    %c0_1 = arith.constant 0 : index
    %3 = vector.load %arg2[%c0, %c0_1] : memref<48x6xf32, #tpu.memory_space<vmem>>, vector<48x6xf32>
    %c0_2 = arith.constant 0 : index
    %c0_3 = arith.constant 0 : index
    %4 = vector.load %arg4[%c0_2, %c0_3] : memref<6x256xf32, #tpu.memory_space<vmem>>, vector<6x256xf32>
    %cst = arith.constant dense<0.000000e+00> : vector<48x256xf32>
    %5 = tpu.matmul %3, %4, %cst {dimension_numbers = #tpu.dot_dimension_numbers<[1], [0], [0], [1], [0, 0, 1, 1], [], []>} : vector<48x6xf32>, vector<6x256xf32>, vector<48x256xf32> -> vector<48x256xf32>
    %c0_4 = arith.constant 0 : index
    %c0_5 = arith.constant 0 : index
    %6 = vector.load %arg3[%c0_4, %c0_5] : memref<48x1xf32, #tpu.memory_space<vmem>>, vector<48x1xf32>
    %7 = vector.broadcast %6 : vector<48x1xf32> to vector<48x256xf32>
    %8 = arith.subf %5, %7 : vector<48x256xf32>
    %9 = vector.extract_strided_slice %8 {offsets = [0, 0], sizes = [16, 256], strides = [1, 1]} : vector<48x256xf32> to vector<16x256xf32>
    %10 = vector.extract_strided_slice %8 {offsets = [16, 0], sizes = [16, 256], strides = [1, 1]} : vector<48x256xf32> to vector<16x256xf32>
    %11 = vector.extract_strided_slice %8 {offsets = [32, 0], sizes = [16, 256], strides = [1, 1]} : vector<48x256xf32> to vector<16x256xf32>
    %12 = arith.mulf %9, %9 : vector<16x256xf32>
    %13 = arith.mulf %10, %10 : vector<16x256xf32>
    %14 = arith.addf %12, %13 : vector<16x256xf32>
    %15 = arith.mulf %11, %11 : vector<16x256xf32>
    %16 = arith.addf %14, %15 : vector<16x256xf32>
    %cst_6 = arith.constant 9.99999993E-9 : f32
    %17 = vector.broadcast %cst_6 : f32 to vector<16x256xf32>
    %18 = arith.addf %16, %17 : vector<16x256xf32>
    %19 = math.sqrt %18 : vector<16x256xf32>
    %cst_7 = arith.constant 1.000000e+01 : f32
    %20 = vector.broadcast %cst_7 : f32 to vector<16x256xf32>
    %21 = arith.minimumf %19, %20 : vector<16x256xf32>
    %c16_i32 = arith.constant 16 : i32
    %22 = arith.muli %arg0, %c16_i32 : i32
    %23 = tpu.iota {dimensions = array<i32: 0>} : vector<16x256xi32>
    %24 = vector.broadcast %22 : i32 to vector<16x256xi32>
    %25 = arith.addi %24, %23 : vector<16x256xi32>
    %c256_i32 = arith.constant 256 : i32
    %26 = arith.muli %arg1, %c256_i32 : i32
    %27 = tpu.iota {dimensions = array<i32: 1>} : vector<16x256xi32>
    %28 = vector.broadcast %26 : i32 to vector<16x256xi32>
    %29 = arith.addi %28, %27 : vector<16x256xi32>
    %c10_i32 = arith.constant 10 : i32
    %30 = vector.broadcast %c10_i32 : i32 to vector<16x256xi32>
    %31 = arith.cmpi slt, %25, %30 : vector<16x256xi32>
    %c200_i32 = arith.constant 200 : i32
    %32 = vector.broadcast %c200_i32 : i32 to vector<16x256xi32>
    %33 = arith.cmpi slt, %29, %32 : vector<16x256xi32>
    %34 = arith.andi %31, %33 : vector<16x256xi1>
    %cst_8 = arith.constant 0.000000e+00 : f32
    %35 = vector.broadcast %cst_8 : f32 to vector<16x256xf32>
    %36 = arith.select %34, %21, %35 : vector<16x256xi1>, vector<16x256xf32>
    %37 = vector.extract_strided_slice %36 {offsets = [0, 0], sizes = [8, 128], strides = [1, 1]} : vector<16x256xf32> to vector<8x128xf32>
    %38 = vector.extract_strided_slice %36 {offsets = [0, 128], sizes = [8, 128], strides = [1, 1]} : vector<16x256xf32> to vector<8x128xf32>
    %39 = arith.addf %37, %38 : vector<8x128xf32>
    %40 = vector.extract_strided_slice %36 {offsets = [8, 0], sizes = [8, 128], strides = [1, 1]} : vector<16x256xf32> to vector<8x128xf32>
    %41 = arith.addf %39, %40 : vector<8x128xf32>
    %42 = vector.extract_strided_slice %36 {offsets = [8, 128], sizes = [8, 128], strides = [1, 1]} : vector<16x256xf32> to vector<8x128xf32>
    %43 = arith.addf %41, %42 : vector<8x128xf32>
    %c0_9 = arith.constant 0 : index
    %c0_10 = arith.constant 0 : index
    %44 = vector.load %arg5[%c0_9, %c0_10] : memref<8x128xf32, #tpu.memory_space<vmem>>, vector<8x128xf32>
    %45 = arith.addf %44, %43 : vector<8x128xf32>
    %c0_11 = arith.constant 0 : index
    %c0_12 = arith.constant 0 : index
    %46 = vector.load %arg5[%c0_11, %c0_12] : memref<8x128xf32, #tpu.memory_space<vmem>>, vector<8x128xf32>
    tpu.vector_store %arg5[%c0_11, %c0_12], %45 {strides = array<i32>} : memref<8x128xf32, #tpu.memory_space<vmem>>, vector<8x128xf32>,
    return
  }
  func.func @transform_0(%arg0: i32, %arg1: i32) -> (i32, i32) {
    %c0_i32 = arith.constant 0 : i32
    %c0_i32_0 = arith.constant 0 : i32
    return %arg0, %c0_i32 : i32, i32
  }
  func.func @transform_1(%arg0: i32, %arg1: i32) -> (i32, i32) {
    %c0_i32 = arith.constant 0 : i32
    %c0_i32_0 = arith.constant 0 : i32
    return %arg0, %c0_i32 : i32, i32
  }
  func.func @transform_2(%arg0: i32, %arg1: i32) -> (i32, i32) {
    %c0_i32 = arith.constant 0 : i32
    %c0_i32_0 = arith.constant 0 : i32
    return %c0_i32, %arg1 : i32, i32
  }
  func.func @transform_3(%arg0: i32, %arg1: i32) -> (i32, i32) {
    %c0_i32 = arith.constant 0 : i32
    %c0_i32_0 = arith.constant 0 : i32
    return %arg0, %c0_i32 : i32, i32
  }
}

</mosaic_0001>

<llo_original>
// kernel: tpu_custom_call.1
$region0: #{tpu_custom_call.1}
  #allocation0 [shape = 'u32[]', space=smem, size = 0x4, offset = 0x4, fixed_abs, tag = 'smem constant byte address 0x4 - core index']
  #allocation1 [shape = 'u32[144,128]{1,0:T(1,128)}', space=vmem, size = 0x12000, scoped, tag = 'internal scratch']
  %s0 = inlined_call_operand.vmem [shape: f32[48,6], index: 0, kind: input, shape index: {}]
  %s1 = inlined_call_operand.vmem [shape: f32[48,1], index: 1, kind: input, shape index: {}]
  %s2 = inlined_call_operand.vmem [shape: f32[6,256], index: 2, kind: input, shape index: {}]
  %s3 = inlined_call_operand.hbm [shape: f32[8,128], index: 3, kind: output, shape index: {}]
  %s4 = sld [smem:[#allocation0]]
  $region26: #{tpu_custom_call.1} parent=0
    _
  %s6 = ssub.s32 1, %s4
  %s7 = scalar_select 0, %s6, %s4
  $region1: #{tpu_custom_call.1} parent=0
    #allocation2 [shape = 'u8[4096]{0}', space=vmem, size = 0x1000, scoped, tag = 'output window, operand 0, single buffered']
    #allocation3 [shape = 's32[1]{0}', space=sflag, size = 0x4, scoped, tag = 'scoped memory for tpu_custom_call.1']
    %8 = vsyncpa [#allocation3], 0
    // Predicated region
    $region2: #{tpu_custom_call.1} parent=1 // pred_check
      _
    $region3: #{tpu_custom_call.1} parent=1 // pred_check_branch
      %10 = sbr.rel (0) target = $region5
    $region4: #{tpu_custom_call.1} parent=1 // pred_region
      _
    $region5: #{tpu_custom_call.1} parent=1 // pred_fallthru
      _
    // Predicated region
    $region6: #{tpu_custom_call.1} parent=1 // pred_check
      _
    $region7: #{tpu_custom_call.1} parent=1 // pred_check_branch
      %12 = sbr.rel (0) target = $region9
    $region8: #{tpu_custom_call.1} parent=1 // pred_region
      _
    $region9: #{tpu_custom_call.1} parent=1 // pred_fallthru
      _
    // Predicated region
    $region10: #{tpu_custom_call.1} parent=1 // pred_check
      _
    $region11: #{tpu_custom_call.1} parent=1 // pred_check_branch
      %14 = sbr.rel (0) target = $region13
    $region12: #{tpu_custom_call.1} parent=1 // pred_region
      _
    $region13: #{tpu_custom_call.1} parent=1 // pred_fallthru
      _
    %p15 = scmp.eq.s32.totalorder 0, 0
    // Predicated region
    $region14: #{tpu_custom_call.1} parent=1 // pred_check
      %p16 = pneg %p15
    $region15: #{tpu_custom_call.1} parent=1 // pred_check_branch
      %18 = sbr.rel (%p16) target = $region17
    $region16: #{tpu_custom_call.1} parent=1 // pred_region
      %19 = vst [vmem:[#allocation2] sm:$0xff] 0.0
    $region17: #{tpu_custom_call.1} parent=1 // pred_fallthru
      _
    %v20 = vld [vmem:[%s0] sm:$0xff]
    %v21 = vld [vmem:[%s0 + $0x8] sm:$0xff]
    %v22 = vld [vmem:[%s0 + $0x10] sm:$0xff]
    %v23 = vld [vmem:[%s0 + $0x18] sm:$0xff]
    %v24 = vld [vmem:[%s0 + $0x20] sm:$0xff]
    %v25 = vld [vmem:[%s0 + $0x28] sm:$0xff]
    %v26 = vld [vmem:[%s2] sm:$0x3f]
    %v27 = vld [vmem:[%s2 + $0x8] sm:$0x3f]
    %vm28 = vcmask 48128
    %v30 = vsel %vm28, %v20, 0
    %v33 = vsel %vm28, %v21, 0
    %v36 = vsel %vm28, %v22, 0
    %v39 = vsel %vm28, %v23, 0
    %v42 = vsel %vm28, %v24, 0
    %v45 = vsel %vm28, %v25, 0
    %vm47 = vcmask 1045504
    %v49 = vsel %vm47, %v26, 0
    %v52 = vsel %vm47, %v27, 0
    %54 = vmatprep.subr.mxu0 %v52
    %55 = vmatpush1.msra.mxu0 %v49
    %56 = vmatprep.subr.mxu0 0.0
    %57 = vmatpush1.msra.mxu0 0.0
    %58 = vmatprep.subr.mxu0 0.0
    %59 = vmatpush1.msra.mxu0 0.0
    %60 = vmatprep.subr.mxu0 0.0
    %61 = vmatpush1.msra.mxu0 0.0
    %62 = vmatprep.subr.mxu0 0.0
    %63 = vmatpush1.msra.mxu0 0.0
    %64 = vmatprep.subr.mxu0 0.0
    %65 = vmatpush1.msra.mxu0 0.0
    %66 = vmatprep.subr.mxu0 0.0
    %67 = vmatpush1.msra.mxu0 0.0
    %68 = vmatprep.subr.mxu0 0.0
    %69 = vmatpush1.msra.mxu0 0.0
    %70 = vmatprep.subr.mxu0 0.0
    %71 = vmatpush1.msra.mxu0 0.0
    %72 = vmatprep.subr.mxu0 0.0
    %73 = vmatpush1.msra.mxu0 0.0
    %74 = vmatprep.subr.mxu0 0.0
    %75 = vmatpush1.msra.mxu0 0.0
    %76 = vmatprep.subr.mxu0 0.0
    %77 = vmatpush1.msra.mxu0 0.0
    %78 = vmatprep.subr.mxu0 0.0
    %79 = vmatpush1.msra.mxu0 0.0
    %80 = vmatprep.subr.mxu0 0.0
    %81 = vmatpush1.msra.mxu0 0.0
    %82 = vmatprep.subr.mxu0 0.0
    %83 = vmatpush1.msra.mxu0 0.0
    %84 = vmatprep.subr.mxu0 0.0
    %85 = vmatpush1.msra.mxu0 0.0
    %86 = vmatprep.subr.mxu0 0.0
    %87 = vmatpush1.msra.mxu0 0.0
    %88 = vmatprep.subr.mxu0 0.0
    %89 = vmatpush1.msra.mxu0 0.0
    %90 = vmatprep.subr.mxu0 0.0
    %91 = vmatpush1.msra.mxu0 0.0
    %92 = vmatprep.subr.mxu0 0.0
    %93 = vmatpush1.msra.mxu0 0.0
    %94 = vmatprep.subr.mxu0 0.0
    %95 = vmatpush1.msra.mxu0 0.0
    %96 = vmatprep.subr.mxu0 0.0
    %97 = vmatpush1.msra.mxu0 0.0
    %98 = vmatprep.subr.mxu0 0.0
    %99 = vmatpush1.msra.mxu0 0.0
    %100 = vmatprep.subr.mxu0 0.0
    %101 = vmatpush1.msra.mxu0 0.0
    %102 = vmatprep.subr.mxu0 0.0
    %103 = vmatpush1.msra.mxu0 0.0
    %104 = vmatprep.subr.mxu0 0.0
    %105 = vmatpush1.msra.mxu0 0.0
    %106 = vmatprep.subr.mxu0 0.0
    %107 = vmatpush1.msra.mxu0 0.0
    %108 = vmatprep.subr.mxu0 0.0
    %109 = vmatpush1.msra.mxu0 0.0
    %110 = vmatprep.subr.mxu0 0.0
    %111 = vmatpush1.msra.mxu0 0.0
    %112 = vmatprep.subr.mxu0 0.0
    %113 = vmatpush1.msra.mxu0 0.0
    %114 = vmatprep.subr.mxu0 0.0
    %115 = vmatpush1.msra.mxu0 0.0
    %116 = vmatprep.subr.mxu0 0.0
    %117 = vmatpush1.msra.mxu0 0.0
    %118 = vmatprep.mubr.f32.mxu0 0.0
    %119 = vmatmul.mubr.f32.gmra.mrb[0].mxu0 %v30
    %v120 = vpop.f32.mrb[0].mxu0
    %v121 = vadd.f32 0.0, %v120
    %v122 = vpop.f32.mrb[0].mxu0
    %v123 = vadd.f32 0.0, %v122
    %124 = vmatprep.mubr.f32.mxu0 0.0
    %125 = vmatmul.mubr.f32.gmra.mrb[0].mxu0 %v33
    %v126 = vpop.f32.mrb[0].mxu0
    %v127 = vadd.f32 0.0, %v126
    %v128 = vpop.f32.mrb[0].mxu0
    %v129 = vadd.f32 0.0, %v128
    %130 = vmatprep.mubr.f32.mxu0 0.0
    %131 = vmatmul.mubr.f32.gmra.mrb[0].mxu0 %v36
    %v132 = vpop.f32.mrb[0].mxu0
    %v133 = vadd.f32 0.0, %v132
    %v134 = vpop.f32.mrb[0].mxu0
    %v135 = vadd.f32 0.0, %v134
    %136 = vmatprep.mubr.f32.mxu0 0.0
    %137 = vmatmul.mubr.f32.gmra.mrb[0].mxu0 %v39
    %v138 = vpop.f32.mrb[0].mxu0
    %v139 = vadd.f32 0.0, %v138
    %v140 = vpop.f32.mrb[0].mxu0
    %v141 = vadd.f32 0.0, %v140
    %142 = vmatprep.mubr.f32.mxu0 0.0
    %143 = vmatmul.mubr.f32.gmra.mrb[0].mxu0 %v42
    %v144 = vpop.f32.mrb[0].mxu0
    %v145 = vadd.f32 0.0, %v144
    %v146 = vpop.f32.mrb[0].mxu0
    %v147 = vadd.f32 0.0, %v146
    %148 = vmatprep.mubr.f32.mxu0 0.0
    %149 = vmatmul.mubr.f32.gmra.mrb[0].mxu0 %v45
    %v150 = vpop.f32.mrb[0].mxu0
    %v151 = vadd.f32 0.0, %v150
    %v152 = vpop.f32.mrb[0].mxu0
    %v153 = vadd.f32 0.0, %v152
    %154 = vdwg.mxu0
    %v155 = vld [vmem:[%s1] sm:$0xff]
    %v156 = vld [vmem:[%s1 + $0x8] sm:$0xff]
    %v157 = vld [vmem:[%s1 + $0x10] sm:$0xff]
    %v158 = vld [vmem:[%s1 + $0x18] sm:$0xff]
    %v159 = vld [vmem:[%s1 + $0x20] sm:$0xff]
    %v160 = vld [vmem:[%s1 + $0x28] sm:$0xff]
    %162 = vset.pattern.permute.xlu0 0
    %163 = vperm.xlu0 %162, %v155
    %v164 = vpop.permute.xlu0 %163
    %167 = vset.pattern.permute.xlu0 0
    %168 = vperm.xlu0 %167, %v156
    %v169 = vpop.permute.xlu0 %168
    %172 = vset.pattern.permute.xlu0 0
    %173 = vperm.xlu0 %172, %v157
    %v174 = vpop.permute.xlu0 %173
    %177 = vset.pattern.permute.xlu0 0
    %178 = vperm.xlu0 %177, %v158
    %v179 = vpop.permute.xlu0 %178
    %182 = vset.pattern.permute.xlu0 0
    %183 = vperm.xlu0 %182, %v159
    %v184 = vpop.permute.xlu0 %183
    %187 = vset.pattern.permute.xlu0 0
    %188 = vperm.xlu0 %187, %v160
    %v189 = vpop.permute.xlu0 %188
    %v191 = vsub.f32 %v121, %v164
    %v192 = vsub.f32 %v123, %v164
    %v193 = vsub.f32 %v127, %v169
    %v194 = vsub.f32 %v129, %v169
    %v195 = vsub.f32 %v133, %v174
    %v196 = vsub.f32 %v135, %v174
    %v197 = vsub.f32 %v139, %v179
    %v198 = vsub.f32 %v141, %v179
    %v199 = vsub.f32 %v145, %v184
    %v200 = vsub.f32 %v147, %v184
    %v201 = vsub.f32 %v151, %v189
    %v202 = vsub.f32 %v153, %v189
    %v203 = vmul.f32 %v191, %v191
    %v204 = vmul.f32 %v192, %v192
    %v205 = vmul.f32 %v193, %v193
    %v206 = vmul.f32 %v194, %v194
    %v207 = vmul.f32 %v195, %v195
    %v208 = vmul.f32 %v196, %v196
    %v209 = vmul.f32 %v197, %v197
    %v210 = vmul.f32 %v198, %v198
    %v211 = vadd.f32 %v203, %v207
    %v212 = vadd.f32 %v204, %v208
    %v213 = vadd.f32 %v205, %v209
    %v214 = vadd.f32 %v206, %v210
    %v215 = vmul.f32 %v199, %v199
    %v216 = vmul.f32 %v200, %v200
    %v217 = vmul.f32 %v201, %v201
    %v218 = vmul.f32 %v202, %v202
    %v219 = vadd.f32 %v211, %v215
    %v220 = vadd.f32 %v212, %v216
    %v221 = vadd.f32 %v213, %v217
    %v222 = vadd.f32 %v214, %v218
    %v223 = vadd.f32 %v219, 1e-08
    %v224 = vadd.f32 %v220, 1e-08
    %v225 = vadd.f32 %v221, 1e-08
    %v226 = vadd.f32 %v222, 1e-08
    %v227 = vrsqrt.pop %v223
    %v228 = vmul.f32 %v223, %v227
    %vm229 = vcmp.eq.f32.partialorder %v223, inf
    %v230 = vsel %vm229, %v223, %v228
    %vm231 = vcmp.eq.f32.partialorder %v223, 0.0
    %v232 = vand.u32 %v223, 2147483648
    %v233 = vsel %vm231, %v232, %v230
    %v234 = vrsqrt.pop %v224
    %v235 = vmul.f32 %v224, %v234
    %vm236 = vcmp.eq.f32.partialorder %v224, inf
    %v237 = vsel %vm236, %v224, %v235
    %vm238 = vcmp.eq.f32.partialorder %v224, 0.0
    %v239 = vand.u32 %v224, 2147483648
    %v240 = vsel %vm238, %v239, %v237
    %v241 = vrsqrt.pop %v225
    %v242 = vmul.f32 %v225, %v241
    %vm243 = vcmp.eq.f32.partialorder %v225, inf
    %v244 = vsel %vm243, %v225, %v242
    %vm245 = vcmp.eq.f32.partialorder %v225, 0.0
    %v246 = vand.u32 %v225, 2147483648
    %v247 = vsel %vm245, %v246, %v244
    %v248 = vrsqrt.pop %v226
    %v249 = vmul.f32 %v226, %v248
    %vm250 = vcmp.eq.f32.partialorder %v226, inf
    %v251 = vsel %vm250, %v226, %v249
    %vm252 = vcmp.eq.f32.partialorder %v226, 0.0
    %v253 = vand.u32 %v226, 2147483648
    %v254 = vsel %vm252, %v253, %v251
    %v255 = vmin.f32 %v233, 10.0
    %v256 = vmin.f32 %v240, 10.0
    %v257 = vmin.f32 %v247, 10.0
    %v258 = vmin.f32 %v254, 10.0
    %s259 = smul.u32 0, 16
    %v260 = vlaneseq
    %v261 = vshrl.u32 %v260, 7
    %v262 = vadd.s32 %v261, 8
    %v263 = vstv %s259
    %v264 = vadd.s32 %v263, %v261
    %v265 = vadd.s32 %v263, %v262
    %s266 = smul.u32 0, 256
    %v267 = vlaneseq
    %v268 = vand.u32 %v267, 127
    %v269 = vadd.s32 %v268, 128
    %v270 = vstv %s266
    %v271 = vadd.s32 %v270, %v268
    %v272 = vadd.s32 %v270, %v269
    %vm273 = vcmp.lt.s32.totalorder %v264, 10
    %vm274 = vcmp.lt.s32.totalorder %v265, 10
    %vm275 = vcmp.lt.s32.totalorder %v271, 200
    %vm276 = vcmp.lt.s32.totalorder %v272, 200
    %vm277 = vmand %vm273, %vm275
    %vm278 = vmand %vm273, %vm276
    %vm279 = vmand %vm274, %vm275
    %vm280 = vmand %vm274, %vm276
    %v281 = vsel %vm277, %v255, 0.0
    %v282 = vsel %vm278, %v256, 0.0
    %v283 = vsel %vm279, %v257, 0.0
    %v284 = vsel %vm280, %v258, 0.0
    %v285 = vadd.f32 %v281, %v282
    %v286 = vadd.f32 %v285, %v283
    %v287 = vadd.f32 %v286, %v284
    %v288 = vld [vmem:[#allocation2] sm:$0xff]
    %v289 = vadd.f32 %v288, %v287
    %290 = vst [vmem:[#allocation2] sm:$0xff] %v289
    // Predicated region
    $region18: #{tpu_custom_call.1} parent=1 // pred_check
      _
    $region19: #{tpu_custom_call.1} parent=1 // pred_check_branch
      %292 = sbr.rel (0) target = $region21
    $region20: #{tpu_custom_call.1} parent=1 // pred_region
      %s294 = ssub.s32 128, 128
      %295 = vsyncadd [#allocation3], %s294
      %s297 = sshll.u32 [#allocation2], 4
      %s298 = int_to_ptr.vmem [resolvable:$true] %s297
      %300 = dma.vmem_to_hbm [thread:$0]  %s298, 128, %s3, [#allocation3]
    $region21: #{tpu_custom_call.1} parent=1 // pred_fallthru
      _
    // Predicated region
    $region22: #{tpu_custom_call.1} parent=1 // pred_check
      _
    $region23: #{tpu_custom_call.1} parent=1 // pred_check_branch
      %302 = sbr.rel (0) target = $region25
    $region24: #{tpu_custom_call.1} parent=1 // pred_region
      %303 = dma.done [#allocation3], 128
    $region25: #{tpu_custom_call.1} parent=1 // pred_fallthru
      _
    %304 = vsyncpa [#allocation3], 1

</llo_original>
